<compile_context>
chip_gen: v5e
topology: v5e:2x2
jax: 0.10.0
libtpu: 0.0.40
codegen_flags: <defaults>
</compile_context>

<pallas_src>
import jax
import jax.numpy as jnp
from jax.experimental import pallas as pl
from jax.experimental.pallas import tpu as pltpu

D_IN, H1, H2, D_OUT = 28 * 28, 256, 64, 10
H2_PAD = 128   # lane-dense padded hidden-2 width; cols 64..127 are zero
OUT_PAD = 128  # lane-dense padded logit width; real logits live in [:, :D_OUT]


def mlp_kernel(x_ref, w1_ref, b1_ref, w2_ref, b2_ref, w3_ref, b3_ref, o_ref):
    # fc1: (TB, 784) @ (784, 256) + b1, ReLU.  bf16 operands, f32 accumulation.
    h = jnp.dot(x_ref[...], w1_ref[...], preferred_element_type=jnp.float32)
    h = jnp.maximum(h + b1_ref[...], 0.0)
    # fc2 (padded): (TB, 256) @ (256, 128) + b2p, ReLU; cols 64..127 stay 0.
    h = jnp.dot(h.astype(jnp.bfloat16), w2_ref[...],
                preferred_element_type=jnp.float32)
    h = jnp.maximum(h + b2_ref[...], 0.0)
    # fc3 (padded): (TB, 128) @ (128, 128) + b3p; cols 10..127 stay 0.
    h = jnp.dot(h.astype(jnp.bfloat16), w3_ref[...],
                preferred_element_type=jnp.float32)
    o_ref[...] = (h + b3_ref[...]).astype(o_ref.dtype)


def net_forward(x, params, tb=2048):
    w1, b1, w2, b2, w3, b3 = params
    B = x.shape[0]

    # Zero-pad H2 (64 -> 128) and the logits (10 -> 128) for lane-dense vregs.
    # ReLU keeps padded fc2 channels at exactly 0 and w3p rows 64..127 are 0,
    # so the result is numerically identical to the unpadded network.
    w2p = jnp.zeros((H1, H2_PAD), w2.dtype).at[:, :H2].set(w2)
    b2p = jnp.zeros((1, H2_PAD), b2.dtype).at[:, :H2].set(b2)
    w3p = jnp.zeros((H2_PAD, OUT_PAD), w3.dtype).at[:H2, :D_OUT].set(w3)
    b3p = jnp.zeros((1, OUT_PAD), b3.dtype).at[:, :D_OUT].set(b3)

    # Batch tile: multiple of 16 (bf16 sublane packing), capped at `tb`.
    tb = max(16, min(tb, pl.next_power_of_2(B)))
    if B >= 32:
        # Guarantee >= 2 grid tiles so v7x uses both TensorCores and the
        # x-DMA / compute pipeline actually overlaps.
        tb = min(tb, max(16, (pl.next_power_of_2(B) // 2 // 16) * 16))
    n_tiles = pl.cdiv(B, tb)
    b_pad = n_tiles * tb
    x = x.astype(jnp.bfloat16)
    if b_pad != B:
        x = jnp.pad(x, ((0, b_pad - B), (0, 0)))

    flops = 2 * b_pad * (D_IN * H1 + H1 * H2_PAD + H2_PAD * OUT_PAD)
    bytes_accessed = (
        x.size * x.dtype.itemsize
        + sum(int(p.size) * p.dtype.itemsize
              for p in (w1, b1, w2p, b2p, w3p, b3p))
        + b_pad * OUT_PAD * 2)  # bf16 writeback

    # x is the only streamed operand; triple-buffer it when there are enough
    # grid steps for the extra look-ahead to matter.
    if n_tiles >= 3:
        x_spec = pl.BlockSpec((tb, D_IN), lambda i: (i, 0),
                              pipeline_mode=pl.Buffered(3))
    else:
        x_spec = pl.BlockSpec((tb, D_IN), lambda i: (i, 0))

    out = pl.pallas_call(
        mlp_kernel,
        out_shape=jax.ShapeDtypeStruct((b_pad, OUT_PAD), jnp.bfloat16),
        grid=(n_tiles,),
        in_specs=[
            x_spec,                                      # x: tiled over batch
            pl.BlockSpec((D_IN, H1), lambda i: (0, 0)),  # weights/biases stay
            pl.BlockSpec((1, H1), lambda i: (0, 0)),     # resident in VMEM
            pl.BlockSpec((H1, H2_PAD), lambda i: (0, 0)),
            pl.BlockSpec((1, H2_PAD), lambda i: (0, 0)),
            pl.BlockSpec((H2_PAD, OUT_PAD), lambda i: (0, 0)),
            pl.BlockSpec((1, OUT_PAD), lambda i: (0, 0)),
        ],
        out_specs=pl.BlockSpec((tb, OUT_PAD), lambda i: (i, 0)),
        compiler_params=pltpu.CompilerParams(
            dimension_semantics=("parallel",)),
        cost_estimate=pl.CostEstimate(
            flops=flops, transcendentals=0, bytes_accessed=bytes_accessed),
    )(x, w1, b1, w2p, b2p, w3p, b3p)
    # NOTE: if the consumer (loss/argmax) can accept the padded (b_pad, 128)
    # bf16 logits, return `out` directly to skip this extra slice kernel.
    return out[:B, :D_OUT]


def init_params(key):
    # Deterministic init mimicking PyTorch Linear's U(-1/sqrt(fan_in), +1/sqrt(fan_in)).
    # Weights stored bf16 (halves HBM traffic); biases stay f32.
    ks = jax.random.split(key, 6)

    def lin(kw, kb, fan_in, fan_out):
        bound = 1.0 / jnp.sqrt(fan_in)
        w = jax.random.uniform(kw, (fan_in, fan_out), jnp.float32, -bound, bound)
        b = jax.random.uniform(kb, (1, fan_out), jnp.float32, -bound, bound)
        return w.astype(jnp.bfloat16), b

    w1, b1 = lin(ks[0], ks[1], D_IN, H1)
    w2, b2 = lin(ks[2], ks[3], H1, H2)
    w3, b3 = lin(ks[4], ks[5], H2, D_OUT)
    return (w1, b1, w2, b2, w3, b3)


def reference_forward(x, params):
    # Pure-JAX reference with the same operand dtypes (bf16 in, f32 acc).
    w1, b1, w2, b2, w3, b3 = params
    h = jnp.dot(x.astype(jnp.bfloat16), w1, preferred_element_type=jnp.float32)
    h = jnp.maximum(h + b1, 0.0)
    h = jnp.dot(h.astype(jnp.bfloat16), w2, preferred_element_type=jnp.float32)
    h = jnp.maximum(h + b2, 0.0)
    h = jnp.dot(h.astype(jnp.bfloat16), w3, preferred_element_type=jnp.float32)
    return h + b3


if __name__ == "__main__":
    key = jax.random.PRNGKey(0)
    k_x, k_p = jax.random.split(key)
    params = init_params(k_p)

    # B=8 exercises the single-tile (padded-to-16-rows) path,
    # B=96 exercises the multi-tile (>=2 grid steps) + batch-padding path.
    for B in (8, 96):
        x = jax.random.normal(jax.random.fold_in(k_x, B), (B, D_IN), jnp.float32)
        out = jax.block_until_ready(net_forward(x, params))
        ref = reference_forward(x, params)
        assert out.shape == (B, D_OUT)
        # Output is bf16 -> allow ~bf16 rounding tolerance vs the f32 reference.
        assert jnp.allclose(out.astype(jnp.float32), ref, atol=2.5e-2, rtol=2.5e-2)
    print("KERNEL_OK")
</pallas_src>

<mosaic_0001>
module attributes {stable_mosaic.version = 11 : i64} {
  func.func @mlp_kernel(%arg0: i32, %arg1: memref<16x784xbf16, #tpu.memory_space<vmem>>, %arg2: memref<784x256xbf16, #tpu.memory_space<vmem>>, %arg3: memref<1x256xf32, #tpu.memory_space<vmem>>, %arg4: memref<256x128xbf16, #tpu.memory_space<vmem>>, %arg5: memref<1x128xf32, #tpu.memory_space<vmem>>, %arg6: memref<128x128xbf16, #tpu.memory_space<vmem>>, %arg7: memref<1x128xf32, #tpu.memory_space<vmem>>, %arg8: memref<16x128xbf16, #tpu.memory_space<vmem>>) attributes {dimension_semantics = [#tpu.dimension_semantics<parallel>], iteration_bounds = array<i64: 1>, scalar_prefetch = 0 : i64, scratch_operands = 0 : i64, tpu.core_type = #tpu.core_type<tc>, window_params = [{transform_indices = @transform_0, window_bounds = array<i64: 16, 784>}, {pipeline_mode = #tpu.pipeline_mode<synchronous>, transform_indices = @transform_1, window_bounds = array<i64: 784, 256>}, {pipeline_mode = #tpu.pipeline_mode<synchronous>, transform_indices = @transform_2, window_bounds = array<i64: 1, 256>}, {pipeline_mode = #tpu.pipeline_mode<synchronous>, transform_indices = @transform_3, window_bounds = array<i64: 256, 128>}, {pipeline_mode = #tpu.pipeline_mode<synchronous>, transform_indices = @transform_4, window_bounds = array<i64: 1, 128>}, {pipeline_mode = #tpu.pipeline_mode<synchronous>, transform_indices = @transform_5, window_bounds = array<i64: 128, 128>}, {pipeline_mode = #tpu.pipeline_mode<synchronous>, transform_indices = @transform_6, window_bounds = array<i64: 1, 128>}, {transform_indices = @transform_7, window_bounds = array<i64: 16, 128>}]} {
    %c0 = arith.constant 0 : index
    %c0_0 = arith.constant 0 : index
    %0 = vector.load %arg1[%c0, %c0_0] : memref<16x784xbf16, #tpu.memory_space<vmem>>, vector<16x784xbf16>
    %c0_1 = arith.constant 0 : index
    %c0_2 = arith.constant 0 : index
    %1 = vector.load %arg2[%c0_1, %c0_2] : memref<784x256xbf16, #tpu.memory_space<vmem>>, vector<784x256xbf16>
    %cst = arith.constant dense<0.000000e+00> : vector<16x256xf32>
    %2 = tpu.matmul %0, %1, %cst {dimension_numbers = #tpu.dot_dimension_numbers<[1], [0], [0], [1], [0, 0, 1, 1], [], []>} : vector<16x784xbf16>, vector<784x256xbf16>, vector<16x256xf32> -> vector<16x256xf32>
    %c0_3 = arith.constant 0 : index
    %c0_4 = arith.constant 0 : index
    %3 = vector.load %arg3[%c0_3, %c0_4] : memref<1x256xf32, #tpu.memory_space<vmem>>, vector<1x256xf32>
    %4 = vector.broadcast %3 : vector<1x256xf32> to vector<16x256xf32>
    %5 = arith.addf %2, %4 : vector<16x256xf32>
    %cst_5 = arith.constant 0.000000e+00 : f32
    %6 = vector.broadcast %cst_5 : f32 to vector<16x256xf32>
    %7 = arith.maximumf %5, %6 : vector<16x256xf32>
    %8 = arith.truncf %7 : vector<16x256xf32> to vector<16x256xbf16>
    %c0_6 = arith.constant 0 : index
    %c0_7 = arith.constant 0 : index
    %9 = vector.load %arg4[%c0_6, %c0_7] : memref<256x128xbf16, #tpu.memory_space<vmem>>, vector<256x128xbf16>
    %cst_8 = arith.constant dense<0.000000e+00> : vector<16x128xf32>
    %10 = tpu.matmul %8, %9, %cst_8 {dimension_numbers = #tpu.dot_dimension_numbers<[1], [0], [0], [1], [0, 0, 1, 1], [], []>} : vector<16x256xbf16>, vector<256x128xbf16>, vector<16x128xf32> -> vector<16x128xf32>
    %c0_9 = arith.constant 0 : index
    %c0_10 = arith.constant 0 : index
    %11 = vector.load %arg5[%c0_9, %c0_10] : memref<1x128xf32, #tpu.memory_space<vmem>>, vector<1x128xf32>
    %12 = vector.broadcast %11 : vector<1x128xf32> to vector<16x128xf32>
    %13 = arith.addf %10, %12 : vector<16x128xf32>
    %cst_11 = arith.constant 0.000000e+00 : f32
    %14 = vector.broadcast %cst_11 : f32 to vector<16x128xf32>
    %15 = arith.maximumf %13, %14 : vector<16x128xf32>
    %16 = arith.truncf %15 : vector<16x128xf32> to vector<16x128xbf16>
    %c0_12 = arith.constant 0 : index
    %c0_13 = arith.constant 0 : index
    %17 = vector.load %arg6[%c0_12, %c0_13] : memref<128x128xbf16, #tpu.memory_space<vmem>>, vector<128x128xbf16>
    %cst_14 = arith.constant dense<0.000000e+00> : vector<16x128xf32>
    %18 = tpu.matmul %16, %17, %cst_14 {dimension_numbers = #tpu.dot_dimension_numbers<[1], [0], [0], [1], [0, 0, 1, 1], [], []>} : vector<16x128xbf16>, vector<128x128xbf16>, vector<16x128xf32> -> vector<16x128xf32>
    %c0_15 = arith.constant 0 : index
    %c0_16 = arith.constant 0 : index
    %19 = vector.load %arg7[%c0_15, %c0_16] : memref<1x128xf32, #tpu.memory_space<vmem>>, vector<1x128xf32>
    %20 = vector.broadcast %19 : vector<1x128xf32> to vector<16x128xf32>
    %21 = arith.addf %18, %20 : vector<16x128xf32>
    %22 = arith.truncf %21 : vector<16x128xf32> to vector<16x128xbf16>
    %c0_17 = arith.constant 0 : index
    %c0_18 = arith.constant 0 : index
    %23 = vector.load %arg8[%c0_17, %c0_18] : memref<16x128xbf16, #tpu.memory_space<vmem>>, vector<16x128xbf16>
    tpu.vector_store %arg8[%c0_17, %c0_18], %22 {strides = array<i32>} : memref<16x128xbf16, #tpu.memory_space<vmem>>, vector<16x128xbf16>,
    return
  }
  func.func @transform_0(%arg0: i32) -> (i32, i32) {
    %c0_i32 = arith.constant 0 : i32
    %c0_i32_0 = arith.constant 0 : i32
    return %arg0, %c0_i32 : i32, i32
  }
  func.func @transform_1(%arg0: i32) -> (i32, i32) {
    %c0_i32 = arith.constant 0 : i32
    %c0_i32_0 = arith.constant 0 : i32
    %c0_i32_1 = arith.constant 0 : i32
    return %c0_i32, %c0_i32_0 : i32, i32
  }
  func.func @transform_2(%arg0: i32) -> (i32, i32) {
    %c0_i32 = arith.constant 0 : i32
    %c0_i32_0 = arith.constant 0 : i32
    %c0_i32_1 = arith.constant 0 : i32
    return %c0_i32, %c0_i32_0 : i32, i32
  }
  func.func @transform_3(%arg0: i32) -> (i32, i32) {
    %c0_i32 = arith.constant 0 : i32
    %c0_i32_0 = arith.constant 0 : i32
    %c0_i32_1 = arith.constant 0 : i32
    return %c0_i32, %c0_i32_0 : i32, i32
  }
  func.func @transform_4(%arg0: i32) -> (i32, i32) {
    %c0_i32 = arith.constant 0 : i32
    %c0_i32_0 = arith.constant 0 : i32
    %c0_i32_1 = arith.constant 0 : i32
    return %c0_i32, %c0_i32_0 : i32, i32
  }
  func.func @transform_5(%arg0: i32) -> (i32, i32) {
    %c0_i32 = arith.constant 0 : i32
    %c0_i32_0 = arith.constant 0 : i32
    %c0_i32_1 = arith.constant 0 : i32
    return %c0_i32, %c0_i32_0 : i32, i32
  }
  func.func @transform_6(%arg0: i32) -> (i32, i32) {
    %c0_i32 = arith.constant 0 : i32
    %c0_i32_0 = arith.constant 0 : i32
    %c0_i32_1 = arith.constant 0 : i32
    return %c0_i32, %c0_i32_0 : i32, i32
  }
  func.func @transform_7(%arg0: i32) -> (i32, i32) {
    %c0_i32 = arith.constant 0 : i32
    %c0_i32_0 = arith.constant 0 : i32
    return %arg0, %c0_i32 : i32, i32
  }
}

</mosaic_0001>

<llo_original>
// kernel: tpu_custom_call.1
$region0: #{tpu_custom_call.1}
  #allocation0 [shape = 'u32[]', space=smem, size = 0x4, offset = 0x4, fixed_abs, tag = 'smem constant byte address 0x4 - core index']
  #allocation1 [shape = 'u32[72,128]{1,0:T(1,128)}', space=vmem, size = 0x9000, scoped, tag = 'internal scratch']
  %s0 = inlined_call_operand.hbm [shape: bf16[16,784], index: 0, kind: input, shape index: {}]
  %s1 = inlined_call_operand.hbm [shape: bf16[784,256], index: 1, kind: input, shape index: {}]
  %s2 = inlined_call_operand.hbm [shape: f32[1,256], index: 2, kind: input, shape index: {}]
  %s3 = inlined_call_operand.hbm [shape: bf16[256,128], index: 3, kind: input, shape index: {}]
  %s4 = inlined_call_operand.vmem [shape: f32[1,128], index: 4, kind: input, shape index: {}]
  %s5 = inlined_call_operand.hbm [shape: bf16[128,128], index: 5, kind: input, shape index: {}]
  %s6 = inlined_call_operand.vmem [shape: f32[1,128], index: 6, kind: input, shape index: {}]
  %s7 = inlined_call_operand.hbm [shape: bf16[16,128], index: 7, kind: output, shape index: {}]
  %s8 = sld [smem:[#allocation0]]
  $region58: #{tpu_custom_call.1} parent=0
    _
  %s10 = ssub.s32 1, %s8
  %s11 = scalar_select 0, %s10, %s8
  $region1: #{tpu_custom_call.1} parent=0
    #allocation2 [shape = 'u8[28672]{0}', space=vmem, size = 0x7000, scoped, tag = 'input window, operand 0, single buffered']
    #allocation3 [shape = 's32[1]{0}', space=sflag, size = 0x4, scoped, tag = 'scoped memory for tpu_custom_call.1']
    #allocation4 [shape = 's32[1]{0}', space=sflag, size = 0x4, scoped, tag = 'scoped memory for tpu_custom_call.1']
    #allocation5 [shape = 'u8[401408]{0}', space=vmem, size = 0x62000, scoped, tag = 'input window, operand 1, single buffered']
    #allocation6 [shape = 's32[1]{0}', space=sflag, size = 0x4, scoped, tag = 'scoped memory for tpu_custom_call.1']
    #allocation7 [shape = 'u8[1024]{0}', space=vmem, size = 0x400, scoped, tag = 'input window, operand 2, single buffered']
    #allocation8 [shape = 'u8[65536]{0}', space=vmem, size = 0x10000, scoped, tag = 'input window, operand 3, single buffered']
    #allocation9 [shape = 's32[1]{0}', space=sflag, size = 0x4, scoped, tag = 'scoped memory for tpu_custom_call.1']
    #allocation10 [shape = 'u8[32768]{0}', space=vmem, size = 0x8000, scoped, tag = 'input window, operand 5, single buffered']
    #allocation11 [shape = 'u8[4096]{0}', space=vmem, size = 0x1000, scoped, tag = 'output window, operand 0, single buffered']
    %12 = vsyncpa [#allocation3], 0
    %13 = vsyncpa [#allocation6], 0
    %14 = vsyncpa [#allocation9], 0
    %15 = vsyncpa [#allocation4], 0
    // Predicated region
    $region2: #{tpu_custom_call.1} parent=1 // pred_check
      _
    $region3: #{tpu_custom_call.1} parent=1 // pred_check_branch
      %17 = sbr.rel (0) target = $region5
    $region4: #{tpu_custom_call.1} parent=1 // pred_region
      %19 = vsyncadd [#allocation3], 0
      %s20 = sshll.u32 %s0, 4
      %s21 = int_to_ptr.hbm [resolvable:$true] %s20
      %s22 = sshll.u32 [#allocation2], 4
      %s23 = int_to_ptr.vmem [resolvable:$true] %s22
      %28 = dma.hbm_to_vmem [thread:$0]  %s21, 896, %s23, [#allocation3], 448, 448, 28
    $region5: #{tpu_custom_call.1} parent=1 // pred_fallthru
      _
    // Predicated region
    $region6: #{tpu_custom_call.1} parent=1 // pred_check
      _
    $region7: #{tpu_custom_call.1} parent=1 // pred_check_branch
      %30 = sbr.rel (0) target = $region9
    $region8: #{tpu_custom_call.1} parent=1 // pred_region
      %32 = vsyncadd [#allocation6], 0
      %s33 = sshll.u32 %s1, 4
      %s34 = int_to_ptr.hbm [resolvable:$true] %s33
      %s35 = sshll.u32 [#allocation5], 4
      %s36 = int_to_ptr.vmem [resolvable:$true] %s35
      %41 = dma.hbm_to_vmem [thread:$0]  %s34, 12544, %s36, [#allocation6], 128, 128, 8
    $region9: #{tpu_custom_call.1} parent=1 // pred_fallthru
      _
    // Predicated region
    $region10: #{tpu_custom_call.1} parent=1 // pred_check
      _
    $region11: #{tpu_custom_call.1} parent=1 // pred_check_branch
      %43 = sbr.rel (0) target = $region13
    $region12: #{tpu_custom_call.1} parent=1 // pred_region
      %45 = vsyncadd [#allocation6], 0
      %s47 = sshll.u32 %s2, 4
      %s48 = int_to_ptr.hbm [resolvable:$true] %s47
      %s49 = sshll.u32 [#allocation7], 4
      %s50 = int_to_ptr.vmem [resolvable:$true] %s49
      %52 = dma.hbm_to_vmem [thread:$0]  %s48, 32, %s50, [#allocation6]
    $region13: #{tpu_custom_call.1} parent=1 // pred_fallthru
      _
    // Predicated region
    $region14: #{tpu_custom_call.1} parent=1 // pred_check
      _
    $region15: #{tpu_custom_call.1} parent=1 // pred_check_branch
      %54 = sbr.rel (0) target = $region17
    $region16: #{tpu_custom_call.1} parent=1 // pred_region
      %56 = vsyncadd [#allocation9], 0
      %s57 = sshll.u32 %s3, 4
      %s58 = int_to_ptr.hbm [resolvable:$true] %s57
      %s59 = sshll.u32 [#allocation8], 4
      %s60 = int_to_ptr.vmem [resolvable:$true] %s59
      %65 = dma.hbm_to_vmem [thread:$0]  %s58, 2048, %s60, [#allocation9], 64, 64, 4
    $region17: #{tpu_custom_call.1} parent=1 // pred_fallthru
      _
    // Predicated region
    $region18: #{tpu_custom_call.1} parent=1 // pred_check
      _
    $region19: #{tpu_custom_call.1} parent=1 // pred_check_branch
      %67 = sbr.rel (0) target = $region21
    $region20: #{tpu_custom_call.1} parent=1 // pred_region
      _
    $region21: #{tpu_custom_call.1} parent=1 // pred_fallthru
      _
    // Predicated region
    $region22: #{tpu_custom_call.1} parent=1 // pred_check
      _
    $region23: #{tpu_custom_call.1} parent=1 // pred_check_branch
      %69 = sbr.rel (0) target = $region25
    $region24: #{tpu_custom_call.1} parent=1 // pred_region
      %71 = vsyncadd [#allocation9], 0
      %s72 = sshll.u32 %s5, 4
      %s73 = int_to_ptr.hbm [resolvable:$true] %s72
      %s74 = sshll.u32 [#allocation10], 4
      %s75 = int_to_ptr.vmem [resolvable:$true] %s74
      %80 = dma.hbm_to_vmem [thread:$0]  %s73, 1024, %s75, [#allocation9], 64, 64, 4
    $region25: #{tpu_custom_call.1} parent=1 // pred_fallthru
      _
    // Predicated region
    $region26: #{tpu_custom_call.1} parent=1 // pred_check
      _
    $region27: #{tpu_custom_call.1} parent=1 // pred_check_branch
      %82 = sbr.rel (0) target = $region29
    $region28: #{tpu_custom_call.1} parent=1 // pred_region
      _
    $region29: #{tpu_custom_call.1} parent=1 // pred_fallthru
      _
    // Predicated region
    $region30: #{tpu_custom_call.1} parent=1 // pred_check
      _
    $region31: #{tpu_custom_call.1} parent=1 // pred_check_branch
      %84 = sbr.rel (0) target = $region33
    $region32: #{tpu_custom_call.1} parent=1 // pred_region
      %86 = dma.done [#allocation3], 896
    $region33: #{tpu_custom_call.1} parent=1 // pred_fallthru
      _
    // Predicated region
    $region34: #{tpu_custom_call.1} parent=1 // pred_check
      _
    $region35: #{tpu_custom_call.1} parent=1 // pred_check_branch
      %88 = sbr.rel (0) target = $region37
    $region36: #{tpu_custom_call.1} parent=1 // pred_region
      %90 = dma.done [#allocation6], 12544
    $region37: #{tpu_custom_call.1} parent=1 // pred_fallthru
      _
    // Predicated region
    $region38: #{tpu_custom_call.1} parent=1 // pred_check
      _
    $region39: #{tpu_custom_call.1} parent=1 // pred_check_branch
      %92 = sbr.rel (0) target = $region41
    $region40: #{tpu_custom_call.1} parent=1 // pred_region
      %94 = dma.done [#allocation6], 32
    $region41: #{tpu_custom_call.1} parent=1 // pred_fallthru
      _
    // Predicated region
    $region42: #{tpu_custom_call.1} parent=1 // pred_check
      _
    $region43: #{tpu_custom_call.1} parent=1 // pred_check_branch
      %96 = sbr.rel (0) target = $region45
    $region44: #{tpu_custom_call.1} parent=1 // pred_region
      %98 = dma.done [#allocation9], 2048
    $region45: #{tpu_custom_call.1} parent=1 // pred_fallthru
      _
    // Predicated region
    $region46: #{tpu_custom_call.1} parent=1 // pred_check
      _
    $region47: #{tpu_custom_call.1} parent=1 // pred_check_branch
      %100 = sbr.rel (0) target = $region49
    $region48: #{tpu_custom_call.1} parent=1 // pred_region
      %102 = dma.done [#allocation9], 1024
    $region49: #{tpu_custom_call.1} parent=1 // pred_fallthru
      _
    %v104 = vld [vmem:[#allocation2] sm:$0xff]
    %v105 = vld [vmem:[#allocation2 + $0x8] sm:$0xff]
    %v106 = vld [vmem:[#allocation2 + $0x10] sm:$0xff]
    %v107 = vld [vmem:[#allocation2 + $0x18] sm:$0xf]
    %v108 = vld [vmem:[#allocation2 + $0x1c] sm:$0xff]
    %v109 = vld [vmem:[#allocation2 + $0x24] sm:$0xff]
    %v110 = vld [vmem:[#allocation2 + $0x2c] sm:$0xff]
    %v111 = vld [vmem:[#allocation2 + $0x34] sm:$0xf]
    %v112 = vld [vmem:[#allocation5] sm:$0xff]
    %v113 = vld [vmem:[#allocation5 + $0x8] sm:$0xff]
    %v114 = vld [vmem:[#allocation5 + $0x10] sm:$0xff]
    %v115 = vld [vmem:[#allocation5 + $0x18] sm:$0xff]
    %v116 = vld [vmem:[#allocation5 + $0x20] sm:$0xff]
    %v117 = vld [vmem:[#allocation5 + $0x28] sm:$0xff]
    %v118 = vld [vmem:[#allocation5 + $0x30] sm:$0xff]
    %v119 = vld [vmem:[#allocation5 + $0x38] sm:$0xff]
    %v120 = vld [vmem:[#allocation5 + $0x40] sm:$0xff]
    %v121 = vld [vmem:[#allocation5 + $0x48] sm:$0xff]
    %v122 = vld [vmem:[#allocation5 + $0x50] sm:$0xff]
    %v123 = vld [vmem:[#allocation5 + $0x58] sm:$0xff]
    %v124 = vld [vmem:[#allocation5 + $0x60] sm:$0xff]
    %v125 = vld [vmem:[#allocation5 + $0x68] sm:$0xff]
    %v126 = vld [vmem:[#allocation5 + $0x70] sm:$0xff]
    %v127 = vld [vmem:[#allocation5 + $0x78] sm:$0xff]
    %v128 = vld [vmem:[#allocation5 + $0x80] sm:$0xff]
    %v129 = vld [vmem:[#allocation5 + $0x88] sm:$0xff]
    %v130 = vld [vmem:[#allocation5 + $0x90] sm:$0xff]
    %v131 = vld [vmem:[#allocation5 + $0x98] sm:$0xff]
    %v132 = vld [vmem:[#allocation5 + $0xa0] sm:$0xff]
    %v133 = vld [vmem:[#allocation5 + $0xa8] sm:$0xff]
    %v134 = vld [vmem:[#allocation5 + $0xb0] sm:$0xff]
    %v135 = vld [vmem:[#allocation5 + $0xb8] sm:$0xff]
    %v136 = vld [vmem:[#allocation5 + $0xc0] sm:$0xff]
    %v137 = vld [vmem:[#allocation5 + $0xc8] sm:$0xff]
    %v138 = vld [vmem:[#allocation5 + $0xd0] sm:$0xff]
    %v139 = vld [vmem:[#allocation5 + $0xd8] sm:$0xff]
    %v140 = vld [vmem:[#allocation5 + $0xe0] sm:$0xff]
    %v141 = vld [vmem:[#allocation5 + $0xe8] sm:$0xff]
    %v142 = vld [vmem:[#allocation5 + $0xf0] sm:$0xff]
    %v143 = vld [vmem:[#allocation5 + $0xf8] sm:$0xff]
    %v144 = vld [vmem:[#allocation5 + $0x100] sm:$0xff]
    %v145 = vld [vmem:[#allocation5 + $0x108] sm:$0xff]
    %v146 = vld [vmem:[#allocation5 + $0x110] sm:$0xff]
    %v147 = vld [vmem:[#allocation5 + $0x118] sm:$0xff]
    %v148 = vld [vmem:[#allocation5 + $0x120] sm:$0xff]
    %v149 = vld [vmem:[#allocation5 + $0x128] sm:$0xff]
    %v150 = vld [vmem:[#allocation5 + $0x130] sm:$0xff]
    %v151 = vld [vmem:[#allocation5 + $0x138] sm:$0xff]
    %v152 = vld [vmem:[#allocation5 + $0x140] sm:$0xff]
    %v153 = vld [vmem:[#allocation5 + $0x148] sm:$0xff]
    %v154 = vld [vmem:[#allocation5 + $0x150] sm:$0xff]
    %v155 = vld [vmem:[#allocation5 + $0x158] sm:$0xff]
    %v156 = vld [vmem:[#allocation5 + $0x160] sm:$0xff]
    %v157 = vld [vmem:[#allocation5 + $0x168] sm:$0xff]
    %v158 = vld [vmem:[#allocation5 + $0x170] sm:$0xff]
    %v159 = vld [vmem:[#allocation5 + $0x178] sm:$0xff]
    %v160 = vld [vmem:[#allocation5 + $0x180] sm:$0xff]
    %v161 = vld [vmem:[#allocation5 + $0x188] sm:$0xff]
    %v162 = vld [vmem:[#allocation5 + $0x190] sm:$0xff]
    %v163 = vld [vmem:[#allocation5 + $0x198] sm:$0xff]
    %v164 = vld [vmem:[#allocation5 + $0x1a0] sm:$0xff]
    %v165 = vld [vmem:[#allocation5 + $0x1a8] sm:$0xff]
    %v166 = vld [vmem:[#allocation5 + $0x1b0] sm:$0xff]
    %v167 = vld [vmem:[#allocation5 + $0x1b8] sm:$0xff]
    %v168 = vld [vmem:[#allocation5 + $0x1c0] sm:$0xff]
    %v169 = vld [vmem:[#allocation5 + $0x1c8] sm:$0xff]
    %v170 = vld [vmem:[#allocation5 + $0x1d0] sm:$0xff]
    %v171 = vld [vmem:[#allocation5 + $0x1d8] sm:$0xff]
    %v172 = vld [vmem:[#allocation5 + $0x1e0] sm:$0xff]
    %v173 = vld [vmem:[#allocation5 + $0x1e8] sm:$0xff]
    %v174 = vld [vmem:[#allocation5 + $0x1f0] sm:$0xff]
    %v175 = vld [vmem:[#allocation5 + $0x1f8] sm:$0xff]
    %v176 = vld [vmem:[#allocation5 + $0x200] sm:$0xff]
    %v177 = vld [vmem:[#allocation5 + $0x208] sm:$0xff]
    %v178 = vld [vmem:[#allocation5 + $0x210] sm:$0xff]
    %v179 = vld [vmem:[#allocation5 + $0x218] sm:$0xff]
    %v180 = vld [vmem:[#allocation5 + $0x220] sm:$0xff]
    %v181 = vld [vmem:[#allocation5 + $0x228] sm:$0xff]
    %v182 = vld [vmem:[#allocation5 + $0x230] sm:$0xff]
    %v183 = vld [vmem:[#allocation5 + $0x238] sm:$0xff]
    %v184 = vld [vmem:[#allocation5 + $0x240] sm:$0xff]
    %v185 = vld [vmem:[#allocation5 + $0x248] sm:$0xff]
    %v186 = vld [vmem:[#allocation5 + $0x250] sm:$0xff]
    %v187 = vld [vmem:[#allocation5 + $0x258] sm:$0xff]
    %v188 = vld [vmem:[#allocation5 + $0x260] sm:$0xff]
    %v189 = vld [vmem:[#allocation5 + $0x268] sm:$0xff]
    %v190 = vld [vmem:[#allocation5 + $0x270] sm:$0xff]
    %v191 = vld [vmem:[#allocation5 + $0x278] sm:$0xff]
    %v192 = vld [vmem:[#allocation5 + $0x280] sm:$0xff]
    %v193 = vld [vmem:[#allocation5 + $0x288] sm:$0xff]
    %v194 = vld [vmem:[#allocation5 + $0x290] sm:$0xff]
    %v195 = vld [vmem:[#allocation5 + $0x298] sm:$0xff]
    %v196 = vld [vmem:[#allocation5 + $0x2a0] sm:$0xff]
    %v197 = vld [vmem:[#allocation5 + $0x2a8] sm:$0xff]
    %v198 = vld [vmem:[#allocation5 + $0x2b0] sm:$0xff]
    %v199 = vld [vmem:[#allocation5 + $0x2b8] sm:$0xff]
    %v200 = vld [vmem:[#allocation5 + $0x2c0] sm:$0xff]
    %v201 = vld [vmem:[#allocation5 + $0x2c8] sm:$0xff]
    %v202 = vld [vmem:[#allocation5 + $0x2d0] sm:$0xff]
    %v203 = vld [vmem:[#allocation5 + $0x2d8] sm:$0xff]
    %v204 = vld [vmem:[#allocation5 + $0x2e0] sm:$0xff]
    %v205 = vld [vmem:[#allocation5 + $0x2e8] sm:$0xff]
    %v206 = vld [vmem:[#allocation5 + $0x2f0] sm:$0xff]
    %v207 = vld [vmem:[#allocation5 + $0x2f8] sm:$0xff]
    %v208 = vld [vmem:[#allocation5 + $0x300] sm:$0xff]
    %v209 = vld [vmem:[#allocation5 + $0x308] sm:$0xff]
    %v210 = vld [vmem:[#allocation7] sm:$0x3]
    %v212 = vperm.slane %v210, 0
    %v213 = vperm.slane %v210, 1
    %v224 = vunpack.c.l.b16 %v104
    %v225 = vunpack.c.h.b16 %v104
    %v226 = vunpack.c.l.b16 %v105
    %v227 = vunpack.c.h.b16 %v105
    %v228 = vunpack.c.l.b16 %v106
    %v229 = vunpack.c.h.b16 %v106
    %v230 = vunpack.c.l.b16 %v107
    %v231 = vunpack.c.l.b16 %v108
    %v232 = vunpack.c.h.b16 %v108
    %v233 = vunpack.c.l.b16 %v109
    %v234 = vunpack.c.h.b16 %v109
    %v235 = vunpack.c.l.b16 %v110
    %v236 = vunpack.c.h.b16 %v110
    %v237 = vunpack.c.l.b16 %v111
    %v238 = vpack.c.b16 %v231, %v224
    %v239 = vpack.c.b16 %v232, %v225
    %v240 = vpack.c.b16 %v233, %v226
    %v241 = vpack.c.b16 %v234, %v227
    %v242 = vpack.c.b16 %v235, %v228
    %v243 = vpack.c.b16 %v236, %v229
    %v244 = vpack.c.b16 %v237, %v230
    %v349 = vunpack.c.l.b16 %v112
    %v350 = vunpack.c.h.b16 %v112
    %v351 = vunpack.c.l.b16 %v113
    %v352 = vunpack.c.h.b16 %v113
    %v353 = vunpack.c.l.b16 %v114
    %v354 = vunpack.c.h.b16 %v114
    %v355 = vunpack.c.l.b16 %v115
    %v356 = vunpack.c.h.b16 %v115
    %v357 = vunpack.c.l.b16 %v116
    %v358 = vunpack.c.h.b16 %v116
    %v359 = vunpack.c.l.b16 %v117
    %v360 = vunpack.c.h.b16 %v117
    %v361 = vunpack.c.l.b16 %v118
    %v362 = vunpack.c.h.b16 %v118
    %v363 = vunpack.c.l.b16 %v119
    %v364 = vunpack.c.h.b16 %v119
    %v365 = vunpack.c.l.b16 %v120
    %v366 = vunpack.c.h.b16 %v120
    %v367 = vunpack.c.l.b16 %v121
    %v368 = vunpack.c.h.b16 %v121
    %v369 = vunpack.c.l.b16 %v122
    %v370 = vunpack.c.h.b16 %v122
    %v371 = vunpack.c.l.b16 %v123
    %v372 = vunpack.c.h.b16 %v123
    %v373 = vunpack.c.l.b16 %v124
    %v374 = vunpack.c.h.b16 %v124
    %v375 = vunpack.c.l.b16 %v125
    %v376 = vunpack.c.h.b16 %v125
    %v377 = vunpack.c.l.b16 %v126
    %v378 = vunpack.c.h.b16 %v126
    %v379 = vunpack.c.l.b16 %v127
    %v380 = vunpack.c.h.b16 %v127
    %v381 = vunpack.c.l.b16 %v128
    %v382 = vunpack.c.h.b16 %v128
    %v383 = vunpack.c.l.b16 %v129
    %v384 = vunpack.c.h.b16 %v129
    %v385 = vunpack.c.l.b16 %v130
    %v386 = vunpack.c.h.b16 %v130
    %v387 = vunpack.c.l.b16 %v131
    %v388 = vunpack.c.h.b16 %v131
    %v389 = vunpack.c.l.b16 %v132
    %v390 = vunpack.c.h.b16 %v132
    %v391 = vunpack.c.l.b16 %v133
    %v392 = vunpack.c.h.b16 %v133
    %v393 = vunpack.c.l.b16 %v134
    %v394 = vunpack.c.h.b16 %v134
    %v395 = vunpack.c.l.b16 %v135
    %v396 = vunpack.c.h.b16 %v135
    %v397 = vunpack.c.l.b16 %v136
    %v398 = vunpack.c.h.b16 %v136
    %v399 = vunpack.c.l.b16 %v137
    %v400 = vunpack.c.h.b16 %v137
    %v401 = vunpack.c.l.b16 %v138
    %v402 = vunpack.c.h.b16 %v138
    %v403 = vunpack.c.l.b16 %v139
    %v404 = vunpack.c.h.b16 %v139
    %v405 = vunpack.c.l.b16 %v140
    %v406 = vunpack.c.h.b16 %v140
    %v407 = vunpack.c.l.b16 %v141
    %v408 = vunpack.c.h.b16 %v141
    %v409 = vunpack.c.l.b16 %v142
    %v410 = vunpack.c.h.b16 %v142
    %v411 = vunpack.c.l.b16 %v143
    %v412 = vunpack.c.h.b16 %v143
    %v413 = vunpack.c.l.b16 %v144
    %v414 = vunpack.c.h.b16 %v144
    %v415 = vunpack.c.l.b16 %v145
    %v416 = vunpack.c.h.b16 %v145
    %v417 = vunpack.c.l.b16 %v146
    %v418 = vunpack.c.h.b16 %v146
    %v419 = vunpack.c.l.b16 %v147
    %v420 = vunpack.c.h.b16 %v147
    %v421 = vunpack.c.l.b16 %v148
    %v422 = vunpack.c.h.b16 %v148
    %v423 = vunpack.c.l.b16 %v149
    %v424 = vunpack.c.h.b16 %v149
    %v425 = vunpack.c.l.b16 %v150
    %v426 = vunpack.c.h.b16 %v150
    %v427 = vunpack.c.l.b16 %v151
    %v428 = vunpack.c.h.b16 %v151
    %v429 = vunpack.c.l.b16 %v152
    %v430 = vunpack.c.h.b16 %v152
    %v431 = vunpack.c.l.b16 %v153
    %v432 = vunpack.c.h.b16 %v153
    %v433 = vunpack.c.l.b16 %v154
    %v434 = vunpack.c.h.b16 %v154
    %v435 = vunpack.c.l.b16 %v155
    %v436 = vunpack.c.h.b16 %v155
    %v437 = vunpack.c.l.b16 %v156
    %v438 = vunpack.c.h.b16 %v156
    %v439 = vunpack.c.l.b16 %v157
    %v440 = vunpack.c.h.b16 %v157
    %v441 = vunpack.c.l.b16 %v158
    %v442 = vunpack.c.h.b16 %v158
    %v443 = vunpack.c.l.b16 %v159
    %v444 = vunpack.c.h.b16 %v159
    %v445 = vunpack.c.l.b16 %v160
    %v446 = vunpack.c.h.b16 %v160
    %v447 = vunpack.c.l.b16 %v161
    %v448 = vunpack.c.h.b16 %v161
    %v449 = vunpack.c.l.b16 %v162
    %v450 = vunpack.c.h.b16 %v162
    %v451 = vunpack.c.l.b16 %v163
    %v452 = vunpack.c.h.b16 %v163
    %v453 = vunpack.c.l.b16 %v164
    %v454 = vunpack.c.h.b16 %v164
    %v455 = vunpack.c.l.b16 %v165
    %v456 = vunpack.c.h.b16 %v165
    %v457 = vunpack.c.l.b16 %v166
    %v458 = vunpack.c.h.b16 %v166
    %v459 = vunpack.c.l.b16 %v167
    %v460 = vunpack.c.h.b16 %v167
    %v461 = vunpack.c.l.b16 %v168
    %v462 = vunpack.c.h.b16 %v168
    %v463 = vunpack.c.l.b16 %v169
    %v464 = vunpack.c.h.b16 %v169
    %v465 = vunpack.c.l.b16 %v170
    %v466 = vunpack.c.h.b16 %v170
    %v467 = vunpack.c.l.b16 %v171
    %v468 = vunpack.c.h.b16 %v171
    %v469 = vunpack.c.l.b16 %v172
    %v470 = vunpack.c.h.b16 %v172
    %v471 = vunpack.c.l.b16 %v173
    %v472 = vunpack.c.h.b16 %v173
    %v473 = vunpack.c.l.b16 %v174
    %v474 = vunpack.c.h.b16 %v174
    %v475 = vunpack.c.l.b16 %v175
    %v476 = vunpack.c.h.b16 %v175
    %v477 = vunpack.c.l.b16 %v176
    %v478 = vunpack.c.h.b16 %v176
    %v479 = vunpack.c.l.b16 %v177
    %v480 = vunpack.c.h.b16 %v177
    %v481 = vunpack.c.l.b16 %v178
    %v482 = vunpack.c.h.b16 %v178
    %v483 = vunpack.c.l.b16 %v179
    %v484 = vunpack.c.h.b16 %v179
    %v485 = vunpack.c.l.b16 %v180
    %v486 = vunpack.c.h.b16 %v180
    %v487 = vunpack.c.l.b16 %v181
    %v488 = vunpack.c.h.b16 %v181
    %v489 = vunpack.c.l.b16 %v182
    %v490 = vunpack.c.h.b16 %v182
    %v491 = vunpack.c.l.b16 %v183
    %v492 = vunpack.c.h.b16 %v183
    %v493 = vunpack.c.l.b16 %v184
    %v494 = vunpack.c.h.b16 %v184
    %v495 = vunpack.c.l.b16 %v185
    %v496 = vunpack.c.h.b16 %v185
    %v497 = vunpack.c.l.b16 %v186
    %v498 = vunpack.c.h.b16 %v186
    %v499 = vunpack.c.l.b16 %v187
    %v500 = vunpack.c.h.b16 %v187
    %v501 = vunpack.c.l.b16 %v188
    %v502 = vunpack.c.h.b16 %v188
    %v503 = vunpack.c.l.b16 %v189
    %v504 = vunpack.c.h.b16 %v189
    %v505 = vunpack.c.l.b16 %v190
    %v506 = vunpack.c.h.b16 %v190
    %v507 = vunpack.c.l.b16 %v191
    %v508 = vunpack.c.h.b16 %v191
    %v509 = vunpack.c.l.b16 %v192
    %v510 = vunpack.c.h.b16 %v192
    %v511 = vunpack.c.l.b16 %v193
    %v512 = vunpack.c.h.b16 %v193
    %v513 = vunpack.c.l.b16 %v194
    %v514 = vunpack.c.h.b16 %v194
    %v515 = vunpack.c.l.b16 %v195
    %v516 = vunpack.c.h.b16 %v195
    %v517 = vunpack.c.l.b16 %v196
    %v518 = vunpack.c.h.b16 %v196
    %v519 = vunpack.c.l.b16 %v197
    %v520 = vunpack.c.h.b16 %v197
    %v521 = vunpack.c.l.b16 %v198
    %v522 = vunpack.c.h.b16 %v198
    %v523 = vunpack.c.l.b16 %v199
    %v524 = vunpack.c.h.b16 %v199
    %v525 = vunpack.c.l.b16 %v200
    %v526 = vunpack.c.h.b16 %v200
    %v527 = vunpack.c.l.b16 %v201
    %v528 = vunpack.c.h.b16 %v201
    %v529 = vunpack.c.l.b16 %v202
    %v530 = vunpack.c.h.b16 %v202
    %v531 = vunpack.c.l.b16 %v203
    %v532 = vunpack.c.h.b16 %v203
    %v533 = vunpack.c.l.b16 %v204
    %v534 = vunpack.c.h.b16 %v204
    %v535 = vunpack.c.l.b16 %v205
    %v536 = vunpack.c.h.b16 %v205
    %v537 = vunpack.c.l.b16 %v206
    %v538 = vunpack.c.h.b16 %v206
    %v539 = vunpack.c.l.b16 %v207
    %v540 = vunpack.c.h.b16 %v207
    %v541 = vunpack.c.l.b16 %v208
    %v542 = vunpack.c.h.b16 %v208
    %v543 = vunpack.c.l.b16 %v209
    %v544 = vunpack.c.h.b16 %v209
    %v545 = vpack.c.b16 %v351, %v349
    %v546 = vpack.c.b16 %v352, %v350
    %v547 = vpack.c.b16 %v355, %v353
    %v548 = vpack.c.b16 %v356, %v354
    %v549 = vpack.c.b16 %v359, %v357
    %v550 = vpack.c.b16 %v360, %v358
    %v551 = vpack.c.b16 %v363, %v361
    %v552 = vpack.c.b16 %v364, %v362
    %v553 = vpack.c.b16 %v367, %v365
    %v554 = vpack.c.b16 %v368, %v366
    %v555 = vpack.c.b16 %v371, %v369
    %v556 = vpack.c.b16 %v372, %v370
    %v557 = vpack.c.b16 %v375, %v373
    %v558 = vpack.c.b16 %v376, %v374
    %v559 = vpack.c.b16 %v379, %v377
    %v560 = vpack.c.b16 %v380, %v378
    %v561 = vpack.c.b16 %v383, %v381
    %v562 = vpack.c.b16 %v384, %v382
    %v563 = vpack.c.b16 %v387, %v385
    %v564 = vpack.c.b16 %v388, %v386
    %v565 = vpack.c.b16 %v391, %v389
    %v566 = vpack.c.b16 %v392, %v390
    %v567 = vpack.c.b16 %v395, %v393
    %v568 = vpack.c.b16 %v396, %v394
    %v569 = vpack.c.b16 %v399, %v397
    %v570 = vpack.c.b16 %v400, %v398
    %v571 = vpack.c.b16 %v403, %v401
    %v572 = vpack.c.b16 %v404, %v402
    %v573 = vpack.c.b16 %v407, %v405
    %v574 = vpack.c.b16 %v408, %v406
    %v575 = vpack.c.b16 %v411, %v409
    %v576 = vpack.c.b16 %v412, %v410
    %v577 = vpack.c.b16 %v415, %v413
    %v578 = vpack.c.b16 %v416, %v414
    %v579 = vpack.c.b16 %v419, %v417
    %v580 = vpack.c.b16 %v420, %v418
    %v581 = vpack.c.b16 %v423, %v421
    %v582 = vpack.c.b16 %v424, %v422
    %v583 = vpack.c.b16 %v427, %v425
    %v584 = vpack.c.b16 %v428, %v426
    %v585 = vpack.c.b16 %v431, %v429
    %v586 = vpack.c.b16 %v432, %v430
    %v587 = vpack.c.b16 %v435, %v433
    %v588 = vpack.c.b16 %v436, %v434
    %v589 = vpack.c.b16 %v439, %v437
    %v590 = vpack.c.b16 %v440, %v438
    %v591 = vpack.c.b16 %v443, %v441
    %v592 = vpack.c.b16 %v444, %v442
    %v593 = vpack.c.b16 %v447, %v445
    %v594 = vpack.c.b16 %v448, %v446
    %v595 = vpack.c.b16 %v451, %v449
    %v596 = vpack.c.b16 %v452, %v450
    %v597 = vpack.c.b16 %v455, %v453
    %v598 = vpack.c.b16 %v456, %v454
    %v599 = vpack.c.b16 %v459, %v457
    %v600 = vpack.c.b16 %v460, %v458
    %v601 = vpack.c.b16 %v463, %v461
    %v602 = vpack.c.b16 %v464, %v462
    %v603 = vpack.c.b16 %v467, %v465
    %v604 = vpack.c.b16 %v468, %v466
    %v605 = vpack.c.b16 %v471, %v469
    %v606 = vpack.c.b16 %v472, %v470
    %v607 = vpack.c.b16 %v475, %v473
    %v608 = vpack.c.b16 %v476, %v474
    %v609 = vpack.c.b16 %v479, %v477
    %v610 = vpack.c.b16 %v480, %v478
    %v611 = vpack.c.b16 %v483, %v481
    %v612 = vpack.c.b16 %v484, %v482
    %v613 = vpack.c.b16 %v487, %v485
    %v614 = vpack.c.b16 %v488, %v486
    %v615 = vpack.c.b16 %v491, %v489
    %v616 = vpack.c.b16 %v492, %v490
    %v617 = vpack.c.b16 %v495, %v493
    %v618 = vpack.c.b16 %v496, %v494
    %v619 = vpack.c.b16 %v499, %v497
    %v620 = vpack.c.b16 %v500, %v498
    %v621 = vpack.c.b16 %v503, %v501
    %v622 = vpack.c.b16 %v504, %v502
    %v623 = vpack.c.b16 %v507, %v505
    %v624 = vpack.c.b16 %v508, %v506
    %v625 = vpack.c.b16 %v511, %v509
    %v626 = vpack.c.b16 %v512, %v510
    %v627 = vpack.c.b16 %v515, %v513
    %v628 = vpack.c.b16 %v516, %v514
    %v629 = vpack.c.b16 %v519, %v517
    %v630 = vpack.c.b16 %v520, %v518
    %v631 = vpack.c.b16 %v523, %v521
    %v632 = vpack.c.b16 %v524, %v522
    %v633 = vpack.c.b16 %v527, %v525
    %v634 = vpack.c.b16 %v528, %v526
    %v635 = vpack.c.b16 %v531, %v529
    %v636 = vpack.c.b16 %v532, %v530
    %v637 = vpack.c.b16 %v535, %v533
    %v638 = vpack.c.b16 %v536, %v534
    %v639 = vpack.c.b16 %v539, %v537
    %v640 = vpack.c.b16 %v540, %v538
    %v641 = vpack.c.b16 %v543, %v541
    %v642 = vpack.c.b16 %v544, %v542
    %vm741 = vcmask 130048
    %v743 = vsel %vm741, %v244, 0
    %745 = vmatpush.bf16.msra.mxu0 %v559
    %746 = vmatpush.bf16.msra.mxu0 %v557
    %747 = vmatpush.bf16.msra.mxu0 %v555
    %748 = vmatpush.bf16.msra.mxu0 %v553
    %749 = vmatpush.bf16.msra.mxu0 %v551
    %750 = vmatpush.bf16.msra.mxu0 %v549
    %751 = vmatpush.bf16.msra.mxu0 %v547
    %752 = vmatpush.bf16.msra.mxu0 %v545
    %753 = vmatmul.bf16.gmra.mxu0 %v238
    %v754 = vpop.f32.mrf.mxu0
    %v755 = vadd.f32 %v212, %v754
    %v756 = vpop.f32.mrf.mxu0
    %v757 = vadd.f32 %v212, %v756
    %758 = vdwg.mxu0
    %759 = vmatpush.bf16.msra.mxu0 %v575
    %760 = vmatpush.bf16.msra.mxu0 %v573
    %761 = vmatpush.bf16.msra.mxu0 %v571
    %762 = vmatpush.bf16.msra.mxu0 %v569
    %763 = vmatpush.bf16.msra.mxu0 %v567
    %764 = vmatpush.bf16.msra.mxu0 %v565
    %765 = vmatpush.bf16.msra.mxu0 %v563
    %766 = vmatpush.bf16.msra.mxu0 %v561
    %767 = vmatmul.bf16.gmra.mxu0 %v239
    %v768 = vpop.f32.mrf.mxu0
    %v769 = vadd.f32 %v755, %v768
    %v770 = vpop.f32.mrf.mxu0
    %v771 = vadd.f32 %v757, %v770
    %772 = vdwg.mxu0
    %773 = vmatpush.bf16.msra.mxu0 %v591
    %774 = vmatpush.bf16.msra.mxu0 %v589
    %775 = vmatpush.bf16.msra.mxu0 %v587
    %776 = vmatpush.bf16.msra.mxu0 %v585
    %777 = vmatpush.bf16.msra.mxu0 %v583
    %778 = vmatpush.bf16.msra.mxu0 %v581
    %779 = vmatpush.bf16.msra.mxu0 %v579
    %780 = vmatpush.bf16.msra.mxu0 %v577
    %781 = vmatmul.bf16.gmra.mxu0 %v240
    %v782 = vpop.f32.mrf.mxu0
    %v783 = vadd.f32 %v769, %v782
    %v784 = vpop.f32.mrf.mxu0
    %v785 = vadd.f32 %v771, %v784
    %786 = vdwg.mxu0
    %787 = vmatpush.bf16.msra.mxu0 %v607
    %788 = vmatpush.bf16.msra.mxu0 %v605
    %789 = vmatpush.bf16.msra.mxu0 %v603
    %790 = vmatpush.bf16.msra.mxu0 %v601
    %791 = vmatpush.bf16.msra.mxu0 %v599
    %792 = vmatpush.bf16.msra.mxu0 %v597
    %793 = vmatpush.bf16.msra.mxu0 %v595
    %794 = vmatpush.bf16.msra.mxu0 %v593
    %795 = vmatmul.bf16.gmra.mxu0 %v241
    %v796 = vpop.f32.mrf.mxu0
    %v797 = vadd.f32 %v783, %v796
    %v798 = vpop.f32.mrf.mxu0
    %v799 = vadd.f32 %v785, %v798
    %800 = vdwg.mxu0
    %801 = vmatpush.bf16.msra.mxu0 %v623
    %802 = vmatpush.bf16.msra.mxu0 %v621
    %803 = vmatpush.bf16.msra.mxu0 %v619
    %804 = vmatpush.bf16.msra.mxu0 %v617
    %805 = vmatpush.bf16.msra.mxu0 %v615
    %806 = vmatpush.bf16.msra.mxu0 %v613
    %807 = vmatpush.bf16.msra.mxu0 %v611
    %808 = vmatpush.bf16.msra.mxu0 %v609
    %809 = vmatmul.bf16.gmra.mxu0 %v242
    %v810 = vpop.f32.mrf.mxu0
    %v811 = vadd.f32 %v797, %v810
    %v812 = vpop.f32.mrf.mxu0
    %v813 = vadd.f32 %v799, %v812
    %814 = vdwg.mxu0
    %815 = vmatpush.bf16.msra.mxu0 %v639
    %816 = vmatpush.bf16.msra.mxu0 %v637
    %817 = vmatpush.bf16.msra.mxu0 %v635
    %818 = vmatpush.bf16.msra.mxu0 %v633
    %819 = vmatpush.bf16.msra.mxu0 %v631
    %820 = vmatpush.bf16.msra.mxu0 %v629
    %821 = vmatpush.bf16.msra.mxu0 %v627
    %822 = vmatpush.bf16.msra.mxu0 %v625
    %823 = vmatmul.bf16.gmra.mxu0 %v243
    %v824 = vpop.f32.mrf.mxu0
    %v825 = vadd.f32 %v811, %v824
    %v826 = vpop.f32.mrf.mxu0
    %v827 = vadd.f32 %v813, %v826
    %828 = vdwg.mxu0
    %829 = vmatpush.bf16.msra.mxu0 0
    %830 = vmatpush.bf16.msra.mxu0 0
    %831 = vmatpush.bf16.msra.mxu0 0
    %832 = vmatpush.bf16.msra.mxu0 0
    %833 = vmatpush.bf16.msra.mxu0 0
    %834 = vmatpush.bf16.msra.mxu0 0
    %835 = vmatpush.bf16.msra.mxu0 0
    %836 = vmatpush.bf16.msra.mxu0 %v641
    %837 = vmatmul.bf16.gmra.mxu0 %v743
    %v838 = vpop.f32.mrf.mxu0
    %v839 = vadd.f32 %v825, %v838
    %v840 = vpop.f32.mrf.mxu0
    %v841 = vadd.f32 %v827, %v840
    %842 = vdwg.mxu0
    %843 = vmatpush.bf16.msra.mxu0 %v560
    %844 = vmatpush.bf16.msra.mxu0 %v558
    %845 = vmatpush.bf16.msra.mxu0 %v556
    %846 = vmatpush.bf16.msra.mxu0 %v554
    %847 = vmatpush.bf16.msra.mxu0 %v552
    %848 = vmatpush.bf16.msra.mxu0 %v550
    %849 = vmatpush.bf16.msra.mxu0 %v548
    %850 = vmatpush.bf16.msra.mxu0 %v546
    %851 = vmatmul.bf16.gmra.mxu0 %v238
    %v852 = vpop.f32.mrf.mxu0
    %v853 = vadd.f32 %v213, %v852
    %v854 = vpop.f32.mrf.mxu0
    %v855 = vadd.f32 %v213, %v854
    %856 = vdwg.mxu0
    %857 = vmatpush.bf16.msra.mxu0 %v576
    %858 = vmatpush.bf16.msra.mxu0 %v574
    %859 = vmatpush.bf16.msra.mxu0 %v572
    %860 = vmatpush.bf16.msra.mxu0 %v570
    %861 = vmatpush.bf16.msra.mxu0 %v568
    %862 = vmatpush.bf16.msra.mxu0 %v566
    %863 = vmatpush.bf16.msra.mxu0 %v564
    %864 = vmatpush.bf16.msra.mxu0 %v562
    %865 = vmatmul.bf16.gmra.mxu0 %v239
    %v866 = vpop.f32.mrf.mxu0
    %v867 = vadd.f32 %v853, %v866
    %v868 = vpop.f32.mrf.mxu0
    %v869 = vadd.f32 %v855, %v868
    %870 = vdwg.mxu0
    %871 = vmatpush.bf16.msra.mxu0 %v592
    %872 = vmatpush.bf16.msra.mxu0 %v590
    %873 = vmatpush.bf16.msra.mxu0 %v588
    %874 = vmatpush.bf16.msra.mxu0 %v586
    %875 = vmatpush.bf16.msra.mxu0 %v584
    %876 = vmatpush.bf16.msra.mxu0 %v582
    %877 = vmatpush.bf16.msra.mxu0 %v580
    %878 = vmatpush.bf16.msra.mxu0 %v578
    %879 = vmatmul.bf16.gmra.mxu0 %v240
    %v880 = vpop.f32.mrf.mxu0
    %v881 = vadd.f32 %v867, %v880
    %v882 = vpop.f32.mrf.mxu0
    %v883 = vadd.f32 %v869, %v882
    %884 = vdwg.mxu0
    %885 = vmatpush.bf16.msra.mxu0 %v608
    %886 = vmatpush.bf16.msra.mxu0 %v606
    %887 = vmatpush.bf16.msra.mxu0 %v604
    %888 = vmatpush.bf16.msra.mxu0 %v602
    %889 = vmatpush.bf16.msra.mxu0 %v600
    %890 = vmatpush.bf16.msra.mxu0 %v598
    %891 = vmatpush.bf16.msra.mxu0 %v596
    %892 = vmatpush.bf16.msra.mxu0 %v594
    %893 = vmatmul.bf16.gmra.mxu0 %v241
    %v894 = vpop.f32.mrf.mxu0
    %v895 = vadd.f32 %v881, %v894
    %v896 = vpop.f32.mrf.mxu0
    %v897 = vadd.f32 %v883, %v896
    %898 = vdwg.mxu0
    %899 = vmatpush.bf16.msra.mxu0 %v624
    %900 = vmatpush.bf16.msra.mxu0 %v622
    %901 = vmatpush.bf16.msra.mxu0 %v620
    %902 = vmatpush.bf16.msra.mxu0 %v618
    %903 = vmatpush.bf16.msra.mxu0 %v616
    %904 = vmatpush.bf16.msra.mxu0 %v614
    %905 = vmatpush.bf16.msra.mxu0 %v612
    %906 = vmatpush.bf16.msra.mxu0 %v610
    %907 = vmatmul.bf16.gmra.mxu0 %v242
    %v908 = vpop.f32.mrf.mxu0
    %v909 = vadd.f32 %v895, %v908
    %v910 = vpop.f32.mrf.mxu0
    %v911 = vadd.f32 %v897, %v910
    %912 = vdwg.mxu0
    %913 = vmatpush.bf16.msra.mxu0 %v640
    %914 = vmatpush.bf16.msra.mxu0 %v638
    %915 = vmatpush.bf16.msra.mxu0 %v636
    %916 = vmatpush.bf16.msra.mxu0 %v634
    %917 = vmatpush.bf16.msra.mxu0 %v632
    %918 = vmatpush.bf16.msra.mxu0 %v630
    %919 = vmatpush.bf16.msra.mxu0 %v628
    %920 = vmatpush.bf16.msra.mxu0 %v626
    %921 = vmatmul.bf16.gmra.mxu0 %v243
    %v922 = vpop.f32.mrf.mxu0
    %v923 = vadd.f32 %v909, %v922
    %v924 = vpop.f32.mrf.mxu0
    %v925 = vadd.f32 %v911, %v924
    %926 = vdwg.mxu0
    %927 = vmatpush.bf16.msra.mxu0 0
    %928 = vmatpush.bf16.msra.mxu0 0
    %929 = vmatpush.bf16.msra.mxu0 0
    %930 = vmatpush.bf16.msra.mxu0 0
    %931 = vmatpush.bf16.msra.mxu0 0
    %932 = vmatpush.bf16.msra.mxu0 0
    %933 = vmatpush.bf16.msra.mxu0 0
    %934 = vmatpush.bf16.msra.mxu0 %v642
    %935 = vmatmul.bf16.gmra.mxu0 %v743
    %v936 = vpop.f32.mrf.mxu0
    %v937 = vadd.f32 %v923, %v936
    %v938 = vpop.f32.mrf.mxu0
    %v939 = vadd.f32 %v925, %v938
    %940 = vdwg.mxu0
    %v941 = vmax.f32 %v839, 0.0
    %v942 = vmax.f32 %v937, 0.0
    %v943 = vmax.f32 %v841, 0.0
    %v944 = vmax.f32 %v939, 0.0
    %v945 = vpack.c.bf16 %v943, %v941
    %v946 = vpack.c.bf16 %v944, %v942
    %v947 = vld [vmem:[#allocation8] sm:$0xf]
    %v948 = vld [vmem:[#allocation8 + $0x4] sm:$0xf]
    %v949 = vld [vmem:[#allocation8 + $0x8] sm:$0xf]
    %v950 = vld [vmem:[#allocation8 + $0xc] sm:$0xf]
    %v951 = vld [vmem:[#allocation8 + $0x10] sm:$0xf]
    %v952 = vld [vmem:[#allocation8 + $0x14] sm:$0xf]
    %v953 = vld [vmem:[#allocation8 + $0x18] sm:$0xf]
    %v954 = vld [vmem:[#allocation8 + $0x1c] sm:$0xf]
    %v955 = vld [vmem:[#allocation8 + $0x20] sm:$0xf]
    %v956 = vld [vmem:[#allocation8 + $0x24] sm:$0xf]
    %v957 = vld [vmem:[#allocation8 + $0x28] sm:$0xf]
    %v958 = vld [vmem:[#allocation8 + $0x2c] sm:$0xf]
    %v959 = vld [vmem:[#allocation8 + $0x30] sm:$0xf]
    %v960 = vld [vmem:[#allocation8 + $0x34] sm:$0xf]
    %v961 = vld [vmem:[#allocation8 + $0x38] sm:$0xf]
    %v962 = vld [vmem:[#allocation8 + $0x3c] sm:$0xf]
    %v963 = vld [vmem:[#allocation8 + $0x40] sm:$0xf]
    %v964 = vld [vmem:[#allocation8 + $0x44] sm:$0xf]
    %v965 = vld [vmem:[#allocation8 + $0x48] sm:$0xf]
    %v966 = vld [vmem:[#allocation8 + $0x4c] sm:$0xf]
    %v967 = vld [vmem:[#allocation8 + $0x50] sm:$0xf]
    %v968 = vld [vmem:[#allocation8 + $0x54] sm:$0xf]
    %v969 = vld [vmem:[#allocation8 + $0x58] sm:$0xf]
    %v970 = vld [vmem:[#allocation8 + $0x5c] sm:$0xf]
    %v971 = vld [vmem:[#allocation8 + $0x60] sm:$0xf]
    %v972 = vld [vmem:[#allocation8 + $0x64] sm:$0xf]
    %v973 = vld [vmem:[#allocation8 + $0x68] sm:$0xf]
    %v974 = vld [vmem:[#allocation8 + $0x6c] sm:$0xf]
    %v975 = vld [vmem:[#allocation8 + $0x70] sm:$0xf]
    %v976 = vld [vmem:[#allocation8 + $0x74] sm:$0xf]
    %v977 = vld [vmem:[#allocation8 + $0x78] sm:$0xf]
    %v978 = vld [vmem:[#allocation8 + $0x7c] sm:$0xf]
    %v979 = vld [vmem:[%s4] sm:$0x1]
    %v981 = vperm.slane %v979, 0
    %v1015 = vunpack.c.l.b16 %v947
    %v1016 = vunpack.c.l.b16 %v948
    %v1017 = vunpack.c.l.b16 %v949
    %v1018 = vunpack.c.l.b16 %v950
    %v1019 = vunpack.c.l.b16 %v951
    %v1020 = vunpack.c.l.b16 %v952
    %v1021 = vunpack.c.l.b16 %v953
    %v1022 = vunpack.c.l.b16 %v954
    %v1023 = vunpack.c.l.b16 %v955
    %v1024 = vunpack.c.l.b16 %v956
    %v1025 = vunpack.c.l.b16 %v957
    %v1026 = vunpack.c.l.b16 %v958
    %v1027 = vunpack.c.l.b16 %v959
    %v1028 = vunpack.c.l.b16 %v960
    %v1029 = vunpack.c.l.b16 %v961
    %v1030 = vunpack.c.l.b16 %v962
    %v1031 = vunpack.c.l.b16 %v963
    %v1032 = vunpack.c.l.b16 %v964
    %v1033 = vunpack.c.l.b16 %v965
    %v1034 = vunpack.c.l.b16 %v966
    %v1035 = vunpack.c.l.b16 %v967
    %v1036 = vunpack.c.l.b16 %v968
    %v1037 = vunpack.c.l.b16 %v969
    %v1038 = vunpack.c.l.b16 %v970
    %v1039 = vunpack.c.l.b16 %v971
    %v1040 = vunpack.c.l.b16 %v972
    %v1041 = vunpack.c.l.b16 %v973
    %v1042 = vunpack.c.l.b16 %v974
    %v1043 = vunpack.c.l.b16 %v975
    %v1044 = vunpack.c.l.b16 %v976
    %v1045 = vunpack.c.l.b16 %v977
    %v1046 = vunpack.c.l.b16 %v978
    %v1047 = vpack.c.b16 %v1016, %v1015
    %v1048 = vpack.c.b16 %v1018, %v1017
    %v1049 = vpack.c.b16 %v1020, %v1019
    %v1050 = vpack.c.b16 %v1022, %v1021
    %v1051 = vpack.c.b16 %v1024, %v1023
    %v1052 = vpack.c.b16 %v1026, %v1025
    %v1053 = vpack.c.b16 %v1028, %v1027
    %v1054 = vpack.c.b16 %v1030, %v1029
    %v1055 = vpack.c.b16 %v1032, %v1031
    %v1056 = vpack.c.b16 %v1034, %v1033
    %v1057 = vpack.c.b16 %v1036, %v1035
    %v1058 = vpack.c.b16 %v1038, %v1037
    %v1059 = vpack.c.b16 %v1040, %v1039
    %v1060 = vpack.c.b16 %v1042, %v1041
    %v1061 = vpack.c.b16 %v1044, %v1043
    %v1062 = vpack.c.b16 %v1046, %v1045
    %1079 = vmatpush.bf16.msra.mxu0 %v1054
    %1080 = vmatpush.bf16.msra.mxu0 %v1053
    %1081 = vmatpush.bf16.msra.mxu0 %v1052
    %1082 = vmatpush.bf16.msra.mxu0 %v1051
    %1083 = vmatpush.bf16.msra.mxu0 %v1050
    %1084 = vmatpush.bf16.msra.mxu0 %v1049
    %1085 = vmatpush.bf16.msra.mxu0 %v1048
    %1086 = vmatpush.bf16.msra.mxu0 %v1047
    %1087 = vmatmul.bf16.gmra.mxu0 %v945
    %v1088 = vpop.f32.mrf.mxu0
    %v1089 = vadd.f32 %v981, %v1088
    %v1090 = vpop.f32.mrf.mxu0
    %v1091 = vadd.f32 %v981, %v1090
    %1092 = vdwg.mxu0
    %1093 = vmatpush.bf16.msra.mxu0 %v1062
    %1094 = vmatpush.bf16.msra.mxu0 %v1061
    %1095 = vmatpush.bf16.msra.mxu0 %v1060
    %1096 = vmatpush.bf16.msra.mxu0 %v1059
    %1097 = vmatpush.bf16.msra.mxu0 %v1058
    %1098 = vmatpush.bf16.msra.mxu0 %v1057
    %1099 = vmatpush.bf16.msra.mxu0 %v1056
    %1100 = vmatpush.bf16.msra.mxu0 %v1055
    %1101 = vmatmul.bf16.gmra.mxu0 %v946
    %v1102 = vpop.f32.mrf.mxu0
    %v1103 = vadd.f32 %v1089, %v1102
    %v1104 = vpop.f32.mrf.mxu0
    %v1105 = vadd.f32 %v1091, %v1104
    %1106 = vdwg.mxu0
    %v1107 = vmax.f32 %v1103, 0.0
    %v1108 = vmax.f32 %v1105, 0.0
    %v1109 = vpack.c.bf16 %v1108, %v1107
    %v1110 = vld [vmem:[#allocation10] sm:$0xf]
    %v1111 = vld [vmem:[#allocation10 + $0x4] sm:$0xf]
    %v1112 = vld [vmem:[#allocation10 + $0x8] sm:$0xf]
    %v1113 = vld [vmem:[#allocation10 + $0xc] sm:$0xf]
    %v1114 = vld [vmem:[#allocation10 + $0x10] sm:$0xf]
    %v1115 = vld [vmem:[#allocation10 + $0x14] sm:$0xf]
    %v1116 = vld [vmem:[#allocation10 + $0x18] sm:$0xf]
    %v1117 = vld [vmem:[#allocation10 + $0x1c] sm:$0xf]
    %v1118 = vld [vmem:[#allocation10 + $0x20] sm:$0xf]
    %v1119 = vld [vmem:[#allocation10 + $0x24] sm:$0xf]
    %v1120 = vld [vmem:[#allocation10 + $0x28] sm:$0xf]
    %v1121 = vld [vmem:[#allocation10 + $0x2c] sm:$0xf]
    %v1122 = vld [vmem:[#allocation10 + $0x30] sm:$0xf]
    %v1123 = vld [vmem:[#allocation10 + $0x34] sm:$0xf]
    %v1124 = vld [vmem:[#allocation10 + $0x38] sm:$0xf]
    %v1125 = vld [vmem:[#allocation10 + $0x3c] sm:$0xf]
    %v1126 = vld [vmem:[%s6] sm:$0x1]
    %v1128 = vperm.slane %v1126, 0
    %v1146 = vunpack.c.l.b16 %v1110
    %v1147 = vunpack.c.l.b16 %v1111
    %v1148 = vunpack.c.l.b16 %v1112
    %v1149 = vunpack.c.l.b16 %v1113
    %v1150 = vunpack.c.l.b16 %v1114
    %v1151 = vunpack.c.l.b16 %v1115
    %v1152 = vunpack.c.l.b16 %v1116
    %v1153 = vunpack.c.l.b16 %v1117
    %v1154 = vunpack.c.l.b16 %v1118
    %v1155 = vunpack.c.l.b16 %v1119
    %v1156 = vunpack.c.l.b16 %v1120
    %v1157 = vunpack.c.l.b16 %v1121
    %v1158 = vunpack.c.l.b16 %v1122
    %v1159 = vunpack.c.l.b16 %v1123
    %v1160 = vunpack.c.l.b16 %v1124
    %v1161 = vunpack.c.l.b16 %v1125
    %v1162 = vpack.c.b16 %v1147, %v1146
    %v1163 = vpack.c.b16 %v1149, %v1148
    %v1164 = vpack.c.b16 %v1151, %v1150
    %v1165 = vpack.c.b16 %v1153, %v1152
    %v1166 = vpack.c.b16 %v1155, %v1154
    %v1167 = vpack.c.b16 %v1157, %v1156
    %v1168 = vpack.c.b16 %v1159, %v1158
    %v1169 = vpack.c.b16 %v1161, %v1160
    %1178 = vmatpush.bf16.msra.mxu0 %v1169
    %1179 = vmatpush.bf16.msra.mxu0 %v1168
    %1180 = vmatpush.bf16.msra.mxu0 %v1167
    %1181 = vmatpush.bf16.msra.mxu0 %v1166
    %1182 = vmatpush.bf16.msra.mxu0 %v1165
    %1183 = vmatpush.bf16.msra.mxu0 %v1164
    %1184 = vmatpush.bf16.msra.mxu0 %v1163
    %1185 = vmatpush.bf16.msra.mxu0 %v1162
    %1186 = vmatmul.bf16.gmra.mxu0 %v1109
    %v1187 = vpop.f32.mrf.mxu0
    %v1188 = vadd.f32 %v1128, %v1187
    %v1189 = vpop.f32.mrf.mxu0
    %v1190 = vadd.f32 %v1128, %v1189
    %1191 = vdwg.mxu0
    %v1192 = vpack.c.bf16 %v1188, %v1188
    %v1193 = vpack.c.bf16 %v1190, %v1190
    %1194 = vst [vmem:[#allocation11] sm:$0xf] %v1192
    %1195 = vst [vmem:[#allocation11 + $0x4] sm:$0xf] %v1193
    // Predicated region
    $region50: #{tpu_custom_call.1} parent=1 // pred_check
      _
    $region51: #{tpu_custom_call.1} parent=1 // pred_check_branch
      %1197 = sbr.rel (0) target = $region53
    $region52: #{tpu_custom_call.1} parent=1 // pred_region
      %1199 = vsyncadd [#allocation4], 0
      %s1200 = sshll.u32 [#allocation11], 4
      %s1201 = int_to_ptr.vmem [resolvable:$true] %s1200
      %s1202 = sshll.u32 %s7, 4
      %s1203 = int_to_ptr.hbm [resolvable:$true] %s1202
      %1208 = dma.vmem_to_hbm [thread:$0]  %s1201, 128, %s1203, [#allocation4], 64, 64, 4
    $region53: #{tpu_custom_call.1} parent=1 // pred_fallthru
      _
    // Predicated region
    $region54: #{tpu_custom_call.1} parent=1 // pred_check
      _
    $region55: #{tpu_custom_call.1} parent=1 // pred_check_branch
      %1210 = sbr.rel (0) target = $region57
    $region56: #{tpu_custom_call.1} parent=1 // pred_region
      %1212 = dma.done [#allocation4], 128
    $region57: #{tpu_custom_call.1} parent=1 // pred_fallthru
      _
    %1213 = vsyncpa [#allocation3], 1
    %1214 = vsyncpa [#allocation6], 1
    %1215 = vsyncpa [#allocation9], 1
    %1216 = vsyncpa [#allocation4], 1

</llo_original>
